<compile_context>
chip_gen: v5e
topology: v5e:2x2
jax: 0.10.0
libtpu: 0.0.40
codegen_flags: <defaults>
</compile_context>

<pallas_src>
import functools
import math

import jax
import jax.numpy as jnp
from jax import lax
from jax.experimental import pallas as pl
from jax.experimental.pallas import tpu as pltpu

LANE = 128


def _round_up(x, m):
    return (x + m - 1) // m * m


def _vmem_limit(need_bytes):
    # headroom over the estimate; cap at 64 MiB (v7x physical VMEM).
    return int(min(max(need_bytes + (16 << 20), 32 << 20), 64 << 20))


# ---------------------------------------------------------------------------
# Kernel 1: per-row-tile transform XW1 = X @ W1 (stored bf16).
# ---------------------------------------------------------------------------
def transform_kernel(x_ref, w1_ref, xw_ref):
    xw_ref[...] = jnp.dot(x_ref[...], w1_ref[...],
                          preferred_element_type=jnp.float32).astype(xw_ref.dtype)


# ---------------------------------------------------------------------------
# Kernel 2: conv1 propagation h1 = A_hat @ XW1 + b1, tiled over (i, k) with an
# f32 VMEM accumulator; XW1 is VMEM-resident (constant block) and sliced with
# pl.ds.  Fused with the conv2 input transform
#   Z = relu(h1) @ W2b + relu(x[root]) @ W2a        (root term passed in)
# so h1 never touches HBM.
# ---------------------------------------------------------------------------
def conv1_kernel(a_ref, xw_ref, b1_ref, w2b_ref, roota_ref, z_ref, acc_ref, *, tk):
    k = pl.program_id(1)
    nk = pl.num_programs(1)

    @pl.when(k == 0)
    def _():
        acc_ref[...] = jnp.zeros_like(acc_ref)

    start = pl.multiple_of(k * tk, LANE)
    acc_ref[...] += jnp.dot(a_ref[...], xw_ref[pl.ds(start, tk), :],
                            preferred_element_type=jnp.float32)

    @pl.when(k == nk - 1)
    def _():
        h1 = acc_ref[...] + b1_ref[...]                           # [tm, Hp] f32
        # dropout: identity (eval mode)
        z = jnp.dot(jnp.maximum(h1, 0.0).astype(w2b_ref.dtype), w2b_ref[...],
                    preferred_element_type=jnp.float32) + roota_ref[...]
        z_ref[...] = z.astype(z_ref.dtype)


# ---------------------------------------------------------------------------
# Kernel 3: conv2 propagation h2 = relu(A_hat @ Z + b2), reduced on the fly to
# per-row-tile partial column sums over the valid (non-padded) rows; the final
# node-mean is a tiny reduction in the wrapper.  Z is VMEM-resident.
# ---------------------------------------------------------------------------
def conv2_kernel(a_ref, z_ref, b2_ref, part_ref, acc_ref, *, tk, num_valid_rows):
    i = pl.program_id(0)
    k = pl.program_id(1)
    nk = pl.num_programs(1)
    tm = acc_ref.shape[0]

    @pl.when(k == 0)
    def _():
        acc_ref[...] = jnp.zeros_like(acc_ref)

    start = pl.multiple_of(k * tk, LANE)
    acc_ref[...] += jnp.dot(a_ref[...], z_ref[pl.ds(start, tk), :],
                            preferred_element_type=jnp.float32)

    @pl.when(k == nk - 1)
    def _():
        h2 = jnp.maximum(acc_ref[...] + b2_ref[...], 0.0)
        rows = i * tm + lax.broadcasted_iota(jnp.int32, (tm, 1), 0)
        h2 = jnp.where(rows < num_valid_rows, h2, 0.0)            # mask pad rows
        part_ref[...] = jnp.sum(h2, axis=0, keepdims=True).reshape(part_ref.shape)


# ---------------------------------------------------------------------------
# Graph densification: A_hat = D^-1/2 (A + I) D^-1/2 (PyG GCNConv defaults),
# written once, directly into the padded low-precision buffer used by kernels.
# ---------------------------------------------------------------------------
def build_padded_adjacency(edge_index, num_nodes, n_pad, dtype=jnp.bfloat16):
    src, dst = edge_index[0], edge_index[1]
    deg = jnp.ones((num_nodes,), jnp.float32).at[dst].add(1.0)   # in-deg + self loop
    d_inv_sqrt = jnp.where(deg > 0, 1.0 / jnp.sqrt(deg), 0.0)
    a = jnp.zeros((n_pad, n_pad), dtype)
    a = a.at[dst, src].add((d_inv_sqrt[dst] * d_inv_sqrt[src]).astype(dtype))
    idx = jnp.arange(num_nodes)
    a = a.at[idx, idx].add((d_inv_sqrt * d_inv_sqrt).astype(dtype))
    return a


def build_normalized_adjacency(edge_index, num_nodes):
    """Dense f32 A_hat for the pure-JAX reference."""
    src, dst = edge_index[0], edge_index[1]
    adj = jnp.zeros((num_nodes, num_nodes), jnp.float32)
    adj = adj.at[dst, src].add(1.0)
    adj = adj + jnp.eye(num_nodes, dtype=jnp.float32)
    deg = adj.sum(axis=1)
    d_inv_sqrt = jnp.where(deg > 0, 1.0 / jnp.sqrt(deg), 0.0)
    return adj * d_inv_sqrt[:, None] * d_inv_sqrt[None, :]


def gcn_forward(posts, edge_index, root_index, params, *, tm=512, tk=512):
    n, din = posts.shape
    w1, b1, w2, b2 = params["w1"], params["b1"], params["w2"], params["b2"]
    hidden = w1.shape[1]
    out_dim = w2.shape[1]
    assert 0 <= root_index < n, "root_index out of range"
    assert tm % LANE == 0 and tk % LANE == 0, "tiles must be multiples of 128"

    # clamp tiles for small graphs to avoid excess zero-padding work
    n_lane = _round_up(n, LANE)
    tm = min(tm, n_lane)
    tk = min(tk, n_lane)
    h_pad = _round_up(hidden, LANE)
    o_pad = _round_up(out_dim, LANE)
    n_pad = _round_up(n, tm * tk // math.gcd(tm, tk))
    n_i = n_pad // tm
    n_k = n_pad // tk

    # ---- wrapper glue: pad lane dims, bf16 operands ---------------------------
    a_pad = build_padded_adjacency(edge_index, n, n_pad)
    x_pad = jnp.zeros((n_pad, din), jnp.float32).at[:n, :].set(posts)
    w1_p = jnp.zeros((din, h_pad), jnp.float32).at[:, :hidden].set(w1)
    b1_p = jnp.zeros((1, h_pad), jnp.float32).at[0, :hidden].set(b1)
    w2b_p = jnp.zeros((h_pad, o_pad), jnp.bfloat16).at[:hidden, :out_dim].set(
        w2[din:].astype(jnp.bfloat16))
    b2_p = jnp.zeros((1, o_pad), jnp.float32).at[0, :out_dim].set(b2)

    # rank-1 root term of conv2's input transform: relu(x[root]) @ W2[:din]
    x_root = lax.dynamic_slice_in_dim(posts, root_index, 1, axis=0)       # [1, Din]
    root_a = jnp.zeros((1, o_pad), jnp.float32).at[:, :out_dim].set(
        jnp.maximum(x_root, 0.0) @ w2[:din])

    # ---- phase 1: XW1 (bf16), row-parallel ------------------------------------
    xw1 = pl.pallas_call(
        transform_kernel,
        out_shape=jax.ShapeDtypeStruct((n_pad, h_pad), jnp.bfloat16),
        grid_spec=pltpu.PrefetchScalarGridSpec(
            num_scalar_prefetch=0, grid=(n_i,),
            in_specs=[pl.BlockSpec((tm, din), lambda i: (i, 0)),
                      pl.BlockSpec((din, h_pad), lambda i: (0, 0))],
            out_specs=pl.BlockSpec((tm, h_pad), lambda i: (i, 0))),
        compiler_params=pltpu.CompilerParams(
            dimension_semantics=("parallel",)),
    )(x_pad, w1_p)

    # conv1_root = A_hat[root] @ XW1 + b1  (rank-1, done in the wrapper so the
    # propagation kernels carry no grid-invariant write-once outputs)
    a_root = lax.dynamic_slice_in_dim(a_pad, root_index, 1, axis=0)       # [1, Npad]
    conv1_root = jnp.dot(a_root, xw1, preferred_element_type=jnp.float32) + b1_p

    bpe = 2  # bf16 bytes
    # ---- phase 2: conv1 propagation fused with conv2 input transform ----------
    need2 = (2 * n_pad * h_pad * bpe        # resident XW1 (double-buffered)
             + 2 * tm * tk * bpe            # A_hat tiles (double-buffered)
             + 2 * tm * o_pad * bpe         # Z output tiles
             + tm * h_pad * 4               # f32 accumulator
             + 2 * h_pad * o_pad * bpe)     # W2b
    z = pl.pallas_call(
        functools.partial(conv1_kernel, tk=tk),
        out_shape=jax.ShapeDtypeStruct((n_pad, o_pad), jnp.bfloat16),
        grid_spec=pltpu.PrefetchScalarGridSpec(
            num_scalar_prefetch=0, grid=(n_i, n_k),
            in_specs=[pl.BlockSpec((tm, tk), lambda i, k: (i, k)),
                      pl.BlockSpec((n_pad, h_pad), lambda i, k: (0, 0)),   # resident
                      pl.BlockSpec((1, h_pad), lambda i, k: (0, 0)),
                      pl.BlockSpec((h_pad, o_pad), lambda i, k: (0, 0)),
                      pl.BlockSpec((1, o_pad), lambda i, k: (0, 0))],
            out_specs=pl.BlockSpec((tm, o_pad), lambda i, k: (i, 0)),
            scratch_shapes=[pltpu.VMEM((tm, h_pad), jnp.float32)]),
        compiler_params=pltpu.CompilerParams(
            dimension_semantics=("parallel", "arbitrary"),
            vmem_limit_bytes=_vmem_limit(need2)),
    )(a_pad, xw1, b1_p, w2b_p, root_a)

    # ---- phase 3: conv2 propagation + relu + per-row-tile partial column sums -
    need3 = (2 * n_pad * o_pad * bpe        # resident Z (double-buffered)
             + 2 * tm * tk * bpe            # A_hat tiles
             + tm * o_pad * 4)              # f32 accumulator
    partials = pl.pallas_call(
        functools.partial(conv2_kernel, tk=tk, num_valid_rows=n),
        out_shape=jax.ShapeDtypeStruct((n_i, 1, o_pad), jnp.float32),
        grid_spec=pltpu.PrefetchScalarGridSpec(
            num_scalar_prefetch=0, grid=(n_i, n_k),
            in_specs=[pl.BlockSpec((tm, tk), lambda i, k: (i, k)),
                      pl.BlockSpec((n_pad, o_pad), lambda i, k: (0, 0)),   # resident
                      pl.BlockSpec((1, o_pad), lambda i, k: (0, 0))],
            out_specs=pl.BlockSpec((1, 1, o_pad), lambda i, k: (i, 0, 0)),
            scratch_shapes=[pltpu.VMEM((tm, o_pad), jnp.float32)]),
        compiler_params=pltpu.CompilerParams(
            dimension_semantics=("parallel", "arbitrary"),
            vmem_limit_bytes=_vmem_limit(need3)),
    )(a_pad, z, b2_p)

    mean_out = jnp.sum(partials.reshape(n_i, o_pad), axis=0, keepdims=True) / n

    # final glue: strip lane padding, concat [conv1Root, mean(conv2Out)]
    return jnp.concatenate([conv1_root[:, :hidden], mean_out[:, :out_dim]], axis=1)


def gcn_reference(posts, edge_index, root_index, params):
    """Pure-JAX f32 reference mirroring the PyTorch forward (eval mode)."""
    a_hat = build_normalized_adjacency(edge_index, posts.shape[0])
    post_root = jnp.broadcast_to(posts[root_index], posts.shape)
    conv1_out = a_hat @ (posts @ params["w1"]) + params["b1"]
    conv1_root = conv1_out[root_index]
    conv2_in = jnp.maximum(jnp.concatenate([post_root, conv1_out], axis=1), 0.0)
    conv2_out = jnp.maximum(a_hat @ (conv2_in @ params["w2"]) + params["b2"], 0.0)
    conv1_root_rep = jnp.broadcast_to(conv1_root, (posts.shape[0], conv1_root.shape[0]))
    feature = jnp.concatenate([conv1_root_rep, conv2_out], axis=1)
    return jnp.mean(feature, axis=0).reshape(1, -1)


if __name__ == "__main__":
    N, INPUT_DIM, HIDDEN_DIM, OUTPUT_DIM = 200, 16, 32, 16
    key = jax.random.PRNGKey(0)
    k1, k2, k3, k4, k5 = jax.random.split(key, 5)

    posts = jax.random.normal(k1, (N, INPUT_DIM), dtype=jnp.float32)
    # deterministic binary tree: parent(i) = (i-1)//2, edges parent -> child
    child = jnp.arange(1, N, dtype=jnp.int32)
    parent = (child - 1) // 2
    edge_index = jnp.stack([parent, child], axis=0)
    root_index = 137  # arbitrary interior node

    params = {
        "w1": jax.random.normal(k2, (INPUT_DIM, HIDDEN_DIM), dtype=jnp.float32) * 0.1,
        "b1": jax.random.normal(k4, (HIDDEN_DIM,), dtype=jnp.float32) * 0.1,
        "w2": jax.random.normal(k3, (HIDDEN_DIM + INPUT_DIM, OUTPUT_DIM),
                                dtype=jnp.float32) * 0.1,
        "b2": jax.random.normal(k5, (OUTPUT_DIM,), dtype=jnp.float32) * 0.1,
    }

    ref = gcn_reference(posts, edge_index, root_index, params)

    # default (large, clamped) tiles: single-tile grid path
    feat_big = jax.block_until_ready(
        gcn_forward(posts, edge_index, root_index, params))
    # small tiles: exercises the 2x2 (i,k) grid, k-accumulation, pad-row masking
    feat_small = jax.block_until_ready(
        gcn_forward(posts, edge_index, root_index, params, tm=128, tk=128))

    for feat in (feat_big, feat_small):
        assert feat.shape == (1, HIDDEN_DIM + OUTPUT_DIM), feat.shape
        # bf16 A_hat / XW1 / Z operands (f32 accumulation) -> loosened tolerance.
        assert jnp.allclose(feat, ref, atol=2e-2, rtol=2e-2), (
            float(jnp.max(jnp.abs(feat - ref))), feat, ref)

    print("KERNEL_OK")
</pallas_src>

<mosaic_0001>
module attributes {stable_mosaic.version = 11 : i64} {
  func.func @transform_kernel(%arg0: i32, %arg1: memref<256x16xf32, #tpu.memory_space<vmem>>, %arg2: memref<16x128xf32, #tpu.memory_space<vmem>>, %arg3: memref<256x128xbf16, #tpu.memory_space<vmem>>) attributes {dimension_semantics = [#tpu.dimension_semantics<parallel>], iteration_bounds = array<i64: 1>, scalar_prefetch = 0 : i64, scratch_operands = 0 : i64, tpu.core_type = #tpu.core_type<tc>, window_params = [{transform_indices = @transform_0, window_bounds = array<i64: 256, 16>}, {pipeline_mode = #tpu.pipeline_mode<synchronous>, transform_indices = @transform_1, window_bounds = array<i64: 16, 128>}, {transform_indices = @transform_2, window_bounds = array<i64: 256, 128>}]} {
    %c0 = arith.constant 0 : index
    %c0_0 = arith.constant 0 : index
    %0 = vector.load %arg1[%c0, %c0_0] : memref<256x16xf32, #tpu.memory_space<vmem>>, vector<256x16xf32>
    %c0_1 = arith.constant 0 : index
    %c0_2 = arith.constant 0 : index
    %1 = vector.load %arg2[%c0_1, %c0_2] : memref<16x128xf32, #tpu.memory_space<vmem>>, vector<16x128xf32>
    %cst = arith.constant dense<0.000000e+00> : vector<256x128xf32>
    %2 = tpu.matmul %0, %1, %cst {dimension_numbers = #tpu.dot_dimension_numbers<[1], [0], [0], [1], [0, 0, 1, 1], [], []>} : vector<256x16xf32>, vector<16x128xf32>, vector<256x128xf32> -> vector<256x128xf32>
    %3 = arith.truncf %2 : vector<256x128xf32> to vector<256x128xbf16>
    %c0_3 = arith.constant 0 : index
    %c0_4 = arith.constant 0 : index
    %4 = vector.load %arg3[%c0_3, %c0_4] : memref<256x128xbf16, #tpu.memory_space<vmem>>, vector<256x128xbf16>
    tpu.vector_store %arg3[%c0_3, %c0_4], %3 {strides = array<i32>} : memref<256x128xbf16, #tpu.memory_space<vmem>>, vector<256x128xbf16>,
    return
  }
  func.func @transform_0(%arg0: i32) -> (i32, i32) {
    %c0_i32 = arith.constant 0 : i32
    %c0_i32_0 = arith.constant 0 : i32
    return %arg0, %c0_i32 : i32, i32
  }
  func.func @transform_1(%arg0: i32) -> (i32, i32) {
    %c0_i32 = arith.constant 0 : i32
    %c0_i32_0 = arith.constant 0 : i32
    %c0_i32_1 = arith.constant 0 : i32
    return %c0_i32, %c0_i32_0 : i32, i32
  }
  func.func @transform_2(%arg0: i32) -> (i32, i32) {
    %c0_i32 = arith.constant 0 : i32
    %c0_i32_0 = arith.constant 0 : i32
    return %arg0, %c0_i32 : i32, i32
  }
}

</mosaic_0001>

<llo_original>
// kernel: tpu_custom_call.1
$region0: #{tpu_custom_call.1}
  #allocation0 [shape = 'u32[]', space=smem, size = 0x4, offset = 0x4, fixed_abs, tag = 'smem constant byte address 0x4 - core index']
  #allocation1 [shape = 'u32[72,128]{1,0:T(1,128)}', space=vmem, size = 0x9000, scoped, tag = 'internal scratch']
  %s0 = inlined_call_operand.vmem [shape: f32[256,16], index: 0, kind: input, shape index: {}]
  %s1 = inlined_call_operand.vmem [shape: f32[16,128], index: 1, kind: input, shape index: {}]
  %s2 = inlined_call_operand.hbm [shape: bf16[256,128], index: 2, kind: output, shape index: {}]
  %s3 = sld [smem:[#allocation0]]
  $region18: #{tpu_custom_call.1} parent=0
    _
  %s5 = ssub.s32 1, %s3
  %s6 = scalar_select 0, %s5, %s3
  $region1: #{tpu_custom_call.1} parent=0
    #allocation2 [shape = 'u8[65536]{0}', space=vmem, size = 0x10000, scoped, tag = 'output window, operand 0, single buffered']
    #allocation3 [shape = 's32[1]{0}', space=sflag, size = 0x4, scoped, tag = 'scoped memory for tpu_custom_call.1']
    %7 = vsyncpa [#allocation3], 0
    // Predicated region
    $region2: #{tpu_custom_call.1} parent=1 // pred_check
      _
    $region3: #{tpu_custom_call.1} parent=1 // pred_check_branch
      %9 = sbr.rel (0) target = $region5
    $region4: #{tpu_custom_call.1} parent=1 // pred_region
      _
    $region5: #{tpu_custom_call.1} parent=1 // pred_fallthru
      _
    // Predicated region
    $region6: #{tpu_custom_call.1} parent=1 // pred_check
      _
    $region7: #{tpu_custom_call.1} parent=1 // pred_check_branch
      %11 = sbr.rel (0) target = $region9
    $region8: #{tpu_custom_call.1} parent=1 // pred_region
      _
    $region9: #{tpu_custom_call.1} parent=1 // pred_fallthru
      _
    %v12 = vld [vmem:[%s0] sm:$0xff]
    %v13 = vld [vmem:[%s0 + $0x8] sm:$0xff]
    %v14 = vld [vmem:[%s0 + $0x10] sm:$0xff]
    %v15 = vld [vmem:[%s0 + $0x18] sm:$0xff]
    %v16 = vld [vmem:[%s0 + $0x20] sm:$0xff]
    %v17 = vld [vmem:[%s0 + $0x28] sm:$0xff]
    %v18 = vld [vmem:[%s0 + $0x30] sm:$0xff]
    %v19 = vld [vmem:[%s0 + $0x38] sm:$0xff]
    %v20 = vld [vmem:[%s0 + $0x40] sm:$0xff]
    %v21 = vld [vmem:[%s0 + $0x48] sm:$0xff]
    %v22 = vld [vmem:[%s0 + $0x50] sm:$0xff]
    %v23 = vld [vmem:[%s0 + $0x58] sm:$0xff]
    %v24 = vld [vmem:[%s0 + $0x60] sm:$0xff]
    %v25 = vld [vmem:[%s0 + $0x68] sm:$0xff]
    %v26 = vld [vmem:[%s0 + $0x70] sm:$0xff]
    %v27 = vld [vmem:[%s0 + $0x78] sm:$0xff]
    %v28 = vld [vmem:[%s0 + $0x80] sm:$0xff]
    %v29 = vld [vmem:[%s0 + $0x88] sm:$0xff]
    %v30 = vld [vmem:[%s0 + $0x90] sm:$0xff]
    %v31 = vld [vmem:[%s0 + $0x98] sm:$0xff]
    %v32 = vld [vmem:[%s0 + $0xa0] sm:$0xff]
    %v33 = vld [vmem:[%s0 + $0xa8] sm:$0xff]
    %v34 = vld [vmem:[%s0 + $0xb0] sm:$0xff]
    %v35 = vld [vmem:[%s0 + $0xb8] sm:$0xff]
    %v36 = vld [vmem:[%s0 + $0xc0] sm:$0xff]
    %v37 = vld [vmem:[%s0 + $0xc8] sm:$0xff]
    %v38 = vld [vmem:[%s0 + $0xd0] sm:$0xff]
    %v39 = vld [vmem:[%s0 + $0xd8] sm:$0xff]
    %v40 = vld [vmem:[%s0 + $0xe0] sm:$0xff]
    %v41 = vld [vmem:[%s0 + $0xe8] sm:$0xff]
    %v42 = vld [vmem:[%s0 + $0xf0] sm:$0xff]
    %v43 = vld [vmem:[%s0 + $0xf8] sm:$0xff]
    %v44 = vld [vmem:[%s1] sm:$0xff]
    %v45 = vld [vmem:[%s1 + $0x8] sm:$0xff]
    %vm46 = vcmask 130048
    %v48 = vsel %vm46, %v12, 0
    %v51 = vsel %vm46, %v13, 0
    %v54 = vsel %vm46, %v14, 0
    %v57 = vsel %vm46, %v15, 0
    %v60 = vsel %vm46, %v16, 0
    %v63 = vsel %vm46, %v17, 0
    %v66 = vsel %vm46, %v18, 0
    %v69 = vsel %vm46, %v19, 0
    %v72 = vsel %vm46, %v20, 0
    %v75 = vsel %vm46, %v21, 0
    %v78 = vsel %vm46, %v22, 0
    %v81 = vsel %vm46, %v23, 0
    %v84 = vsel %vm46, %v24, 0
    %v87 = vsel %vm46, %v25, 0
    %v90 = vsel %vm46, %v26, 0
    %v93 = vsel %vm46, %v27, 0
    %v96 = vsel %vm46, %v28, 0
    %v99 = vsel %vm46, %v29, 0
    %v102 = vsel %vm46, %v30, 0
    %v105 = vsel %vm46, %v31, 0
    %v108 = vsel %vm46, %v32, 0
    %v111 = vsel %vm46, %v33, 0
    %v114 = vsel %vm46, %v34, 0
    %v117 = vsel %vm46, %v35, 0
    %v120 = vsel %vm46, %v36, 0
    %v123 = vsel %vm46, %v37, 0
    %v126 = vsel %vm46, %v38, 0
    %v129 = vsel %vm46, %v39, 0
    %v132 = vsel %vm46, %v40, 0
    %v135 = vsel %vm46, %v41, 0
    %v138 = vsel %vm46, %v42, 0
    %v141 = vsel %vm46, %v43, 0
    %143 = vmatpush.msra.mxu0 0.0
    %144 = vmatpush.msra.mxu0 0.0
    %145 = vmatpush.msra.mxu0 0.0
    %146 = vmatpush.msra.mxu0 0.0
    %147 = vmatpush.msra.mxu0 0.0
    %148 = vmatpush.msra.mxu0 0.0
    %149 = vmatpush.msra.mxu0 0.0
    %150 = vmatpush.msra.mxu0 0.0
    %151 = vmatpush.msra.mxu0 0.0
    %152 = vmatpush.msra.mxu0 0.0
    %153 = vmatpush.msra.mxu0 0.0
    %154 = vmatpush.msra.mxu0 0.0
    %155 = vmatpush.msra.mxu0 0.0
    %156 = vmatpush.msra.mxu0 0.0
    %157 = vmatpush.msra.mxu0 %v45
    %158 = vmatpush.msra.mxu0 %v44
    %159 = vmatmul.f32.gmra.mxu0 %v48
    %v160 = vpop.f32.mrf.mxu0
    %v161 = vadd.f32 0.0, %v160
    %162 = vmatmul.f32.gmra.mxu0 %v51
    %v163 = vpop.f32.mrf.mxu0
    %v164 = vadd.f32 0.0, %v163
    %165 = vmatmul.f32.gmra.mxu0 %v54
    %v166 = vpop.f32.mrf.mxu0
    %v167 = vadd.f32 0.0, %v166
    %168 = vmatmul.f32.gmra.mxu0 %v57
    %v169 = vpop.f32.mrf.mxu0
    %v170 = vadd.f32 0.0, %v169
    %171 = vmatmul.f32.gmra.mxu0 %v60
    %v172 = vpop.f32.mrf.mxu0
    %v173 = vadd.f32 0.0, %v172
    %174 = vmatmul.f32.gmra.mxu0 %v63
    %v175 = vpop.f32.mrf.mxu0
    %v176 = vadd.f32 0.0, %v175
    %177 = vmatmul.f32.gmra.mxu0 %v66
    %v178 = vpop.f32.mrf.mxu0
    %v179 = vadd.f32 0.0, %v178
    %180 = vmatmul.f32.gmra.mxu0 %v69
    %v181 = vpop.f32.mrf.mxu0
    %v182 = vadd.f32 0.0, %v181
    %183 = vmatmul.f32.gmra.mxu0 %v72
    %v184 = vpop.f32.mrf.mxu0
    %v185 = vadd.f32 0.0, %v184
    %186 = vmatmul.f32.gmra.mxu0 %v75
    %v187 = vpop.f32.mrf.mxu0
    %v188 = vadd.f32 0.0, %v187
    %189 = vmatmul.f32.gmra.mxu0 %v78
    %v190 = vpop.f32.mrf.mxu0
    %v191 = vadd.f32 0.0, %v190
    %192 = vmatmul.f32.gmra.mxu0 %v81
    %v193 = vpop.f32.mrf.mxu0
    %v194 = vadd.f32 0.0, %v193
    %195 = vmatmul.f32.gmra.mxu0 %v84
    %v196 = vpop.f32.mrf.mxu0
    %v197 = vadd.f32 0.0, %v196
    %198 = vmatmul.f32.gmra.mxu0 %v87
    %v199 = vpop.f32.mrf.mxu0
    %v200 = vadd.f32 0.0, %v199
    %201 = vmatmul.f32.gmra.mxu0 %v90
    %v202 = vpop.f32.mrf.mxu0
    %v203 = vadd.f32 0.0, %v202
    %204 = vmatmul.f32.gmra.mxu0 %v93
    %v205 = vpop.f32.mrf.mxu0
    %v206 = vadd.f32 0.0, %v205
    %207 = vmatmul.f32.gmra.mxu0 %v96
    %v208 = vpop.f32.mrf.mxu0
    %v209 = vadd.f32 0.0, %v208
    %210 = vmatmul.f32.gmra.mxu0 %v99
    %v211 = vpop.f32.mrf.mxu0
    %v212 = vadd.f32 0.0, %v211
    %213 = vmatmul.f32.gmra.mxu0 %v102
    %v214 = vpop.f32.mrf.mxu0
    %v215 = vadd.f32 0.0, %v214
    %216 = vmatmul.f32.gmra.mxu0 %v105
    %v217 = vpop.f32.mrf.mxu0
    %v218 = vadd.f32 0.0, %v217
    %219 = vmatmul.f32.gmra.mxu0 %v108
    %v220 = vpop.f32.mrf.mxu0
    %v221 = vadd.f32 0.0, %v220
    %222 = vmatmul.f32.gmra.mxu0 %v111
    %v223 = vpop.f32.mrf.mxu0
    %v224 = vadd.f32 0.0, %v223
    %225 = vmatmul.f32.gmra.mxu0 %v114
    %v226 = vpop.f32.mrf.mxu0
    %v227 = vadd.f32 0.0, %v226
    %228 = vmatmul.f32.gmra.mxu0 %v117
    %v229 = vpop.f32.mrf.mxu0
    %v230 = vadd.f32 0.0, %v229
    %231 = vmatmul.f32.gmra.mxu0 %v120
    %v232 = vpop.f32.mrf.mxu0
    %v233 = vadd.f32 0.0, %v232
    %234 = vmatmul.f32.gmra.mxu0 %v123
    %v235 = vpop.f32.mrf.mxu0
    %v236 = vadd.f32 0.0, %v235
    %237 = vmatmul.f32.gmra.mxu0 %v126
    %v238 = vpop.f32.mrf.mxu0
    %v239 = vadd.f32 0.0, %v238
    %240 = vmatmul.f32.gmra.mxu0 %v129
    %v241 = vpop.f32.mrf.mxu0
    %v242 = vadd.f32 0.0, %v241
    %243 = vmatmul.f32.gmra.mxu0 %v132
    %v244 = vpop.f32.mrf.mxu0
    %v245 = vadd.f32 0.0, %v244
    %246 = vmatmul.f32.gmra.mxu0 %v135
    %v247 = vpop.f32.mrf.mxu0
    %v248 = vadd.f32 0.0, %v247
    %249 = vmatmul.f32.gmra.mxu0 %v138
    %v250 = vpop.f32.mrf.mxu0
    %v251 = vadd.f32 0.0, %v250
    %252 = vmatmul.f32.gmra.mxu0 %v141
    %v253 = vpop.f32.mrf.mxu0
    %v254 = vadd.f32 0.0, %v253
    %255 = vdwg.mxu0
    %v256 = vpack.c.bf16 %v161, %v161
    %v257 = vpack.c.bf16 %v164, %v164
    %v258 = vpack.c.bf16 %v167, %v167
    %v259 = vpack.c.bf16 %v170, %v170
    %v260 = vpack.c.bf16 %v173, %v173
    %v261 = vpack.c.bf16 %v176, %v176
    %v262 = vpack.c.bf16 %v179, %v179
    %v263 = vpack.c.bf16 %v182, %v182
    %v264 = vpack.c.bf16 %v185, %v185
    %v265 = vpack.c.bf16 %v188, %v188
    %v266 = vpack.c.bf16 %v191, %v191
    %v267 = vpack.c.bf16 %v194, %v194
    %v268 = vpack.c.bf16 %v197, %v197
    %v269 = vpack.c.bf16 %v200, %v200
    %v270 = vpack.c.bf16 %v203, %v203
    %v271 = vpack.c.bf16 %v206, %v206
    %v272 = vpack.c.bf16 %v209, %v209
    %v273 = vpack.c.bf16 %v212, %v212
    %v274 = vpack.c.bf16 %v215, %v215
    %v275 = vpack.c.bf16 %v218, %v218
    %v276 = vpack.c.bf16 %v221, %v221
    %v277 = vpack.c.bf16 %v224, %v224
    %v278 = vpack.c.bf16 %v227, %v227
    %v279 = vpack.c.bf16 %v230, %v230
    %v280 = vpack.c.bf16 %v233, %v233
    %v281 = vpack.c.bf16 %v236, %v236
    %v282 = vpack.c.bf16 %v239, %v239
    %v283 = vpack.c.bf16 %v242, %v242
    %v284 = vpack.c.bf16 %v245, %v245
    %v285 = vpack.c.bf16 %v248, %v248
    %v286 = vpack.c.bf16 %v251, %v251
    %v287 = vpack.c.bf16 %v254, %v254
    %288 = vst [vmem:[#allocation2] sm:$0xf] %v256
    %289 = vst [vmem:[#allocation2 + $0x4] sm:$0xf] %v257
    %290 = vst [vmem:[#allocation2 + $0x8] sm:$0xf] %v258
    %291 = vst [vmem:[#allocation2 + $0xc] sm:$0xf] %v259
    %292 = vst [vmem:[#allocation2 + $0x10] sm:$0xf] %v260
    %293 = vst [vmem:[#allocation2 + $0x14] sm:$0xf] %v261
    %294 = vst [vmem:[#allocation2 + $0x18] sm:$0xf] %v262
    %295 = vst [vmem:[#allocation2 + $0x1c] sm:$0xf] %v263
    %296 = vst [vmem:[#allocation2 + $0x20] sm:$0xf] %v264
    %297 = vst [vmem:[#allocation2 + $0x24] sm:$0xf] %v265
    %298 = vst [vmem:[#allocation2 + $0x28] sm:$0xf] %v266
    %299 = vst [vmem:[#allocation2 + $0x2c] sm:$0xf] %v267
    %300 = vst [vmem:[#allocation2 + $0x30] sm:$0xf] %v268
    %301 = vst [vmem:[#allocation2 + $0x34] sm:$0xf] %v269
    %302 = vst [vmem:[#allocation2 + $0x38] sm:$0xf] %v270
    %303 = vst [vmem:[#allocation2 + $0x3c] sm:$0xf] %v271
    %304 = vst [vmem:[#allocation2 + $0x40] sm:$0xf] %v272
    %305 = vst [vmem:[#allocation2 + $0x44] sm:$0xf] %v273
    %306 = vst [vmem:[#allocation2 + $0x48] sm:$0xf] %v274
    %307 = vst [vmem:[#allocation2 + $0x4c] sm:$0xf] %v275
    %308 = vst [vmem:[#allocation2 + $0x50] sm:$0xf] %v276
    %309 = vst [vmem:[#allocation2 + $0x54] sm:$0xf] %v277
    %310 = vst [vmem:[#allocation2 + $0x58] sm:$0xf] %v278
    %311 = vst [vmem:[#allocation2 + $0x5c] sm:$0xf] %v279
    %312 = vst [vmem:[#allocation2 + $0x60] sm:$0xf] %v280
    %313 = vst [vmem:[#allocation2 + $0x64] sm:$0xf] %v281
    %314 = vst [vmem:[#allocation2 + $0x68] sm:$0xf] %v282
    %315 = vst [vmem:[#allocation2 + $0x6c] sm:$0xf] %v283
    %316 = vst [vmem:[#allocation2 + $0x70] sm:$0xf] %v284
    %317 = vst [vmem:[#allocation2 + $0x74] sm:$0xf] %v285
    %318 = vst [vmem:[#allocation2 + $0x78] sm:$0xf] %v286
    %319 = vst [vmem:[#allocation2 + $0x7c] sm:$0xf] %v287
    // Predicated region
    $region10: #{tpu_custom_call.1} parent=1 // pred_check
      _
    $region11: #{tpu_custom_call.1} parent=1 // pred_check_branch
      %321 = sbr.rel (0) target = $region13
    $region12: #{tpu_custom_call.1} parent=1 // pred_region
      %323 = vsyncadd [#allocation3], 0
      %s324 = sshll.u32 [#allocation2], 4
      %s325 = int_to_ptr.vmem [resolvable:$true] %s324
      %s326 = sshll.u32 %s2, 4
      %s327 = int_to_ptr.hbm [resolvable:$true] %s326
      %332 = dma.vmem_to_hbm [thread:$0]  %s325, 2048, %s327, [#allocation3], 64, 64, 4
    $region13: #{tpu_custom_call.1} parent=1 // pred_fallthru
      _
    // Predicated region
    $region14: #{tpu_custom_call.1} parent=1 // pred_check
      _
    $region15: #{tpu_custom_call.1} parent=1 // pred_check_branch
      %334 = sbr.rel (0) target = $region17
    $region16: #{tpu_custom_call.1} parent=1 // pred_region
      %336 = dma.done [#allocation3], 2048
    $region17: #{tpu_custom_call.1} parent=1 // pred_fallthru
      _
    %337 = vsyncpa [#allocation3], 1

</llo_original>
